<compile_context>
chip_gen: v7x
topology: tpu7x:2x2x1
jax: 0.10.0
libtpu: 0.0.40
codegen_flags: <defaults>
</compile_context>

<pallas_src>
import math

import jax
import jax.numpy as jnp
from jax import lax
from jax.experimental import pallas as pl
from jax.experimental.pallas import tpu as pltpu


_LANES = 128
_MAX_BLOCK_ROWS_F32 = 4096        # 4096 * 128 * 4B = 2 MiB per input block (f32-equiv)
_SMALL_D_MAX_ROWS = 1024          # rows <= this -> single-step batched kernel
_SMALL_D_TARGET_BYTES = 1 << 20   # ~1 MiB (f32-equivalent) of samples per grid step
_VMEM_LIMIT_BYTES = 32 * 1024 * 1024


def _round_up(v, m):
    return ((v + m - 1) // m) * m


def _sublane_multiple(dtype):
    # Min second-minor tile multiple per dtype packing: f32->8, bf16->16, int8/fp8->32.
    itemsize = jnp.dtype(dtype).itemsize
    return max(8, 32 // max(itemsize, 1))


# ---------------------------------------------------------------------------
# Small-D path: one grid step per group of G samples, no cross-step state.
# ---------------------------------------------------------------------------
def _dice_small_kernel(x_ref, t_ref, inter_ref, tot_ref):
    # x_ref / t_ref: (G, rows, 128) native dtype.
    # inter_ref / tot_ref: (G, 128) f32 lane partial sums (collapsed in JAX).
    x = x_ref[...].astype(jnp.float32)
    t = t_ref[...].astype(jnp.float32)
    inter_ref[...] = jnp.sum(x * t, axis=1)
    tot_ref[...] = jnp.sum(x + t, axis=1)


def _dice_partials_small(x, t, n, rows, itemsize):
    per_sample_f32 = rows * _LANES * 4
    g = max(1, min(n, _SMALL_D_TARGET_BYTES // per_sample_f32))
    n_groups = pl.cdiv(n, g)

    inter_l, tot_l = pl.pallas_call(
        _dice_small_kernel,
        out_shape=(
            jax.ShapeDtypeStruct((n_groups, g, _LANES), jnp.float32),
            jax.ShapeDtypeStruct((n_groups, g, _LANES), jnp.float32),
        ),
        grid_spec=pltpu.PrefetchScalarGridSpec(
            num_scalar_prefetch=0,
            grid=(n_groups,),
            in_specs=[
                pl.BlockSpec((g, rows, _LANES), lambda i: (i, 0, 0)),
                pl.BlockSpec((g, rows, _LANES), lambda i: (i, 0, 0)),
            ],
            out_specs=(
                pl.BlockSpec((None, g, _LANES), lambda i: (i, 0, 0)),
                pl.BlockSpec((None, g, _LANES), lambda i: (i, 0, 0)),
            ),
        ),
        compiler_params=pltpu.CompilerParams(
            dimension_semantics=("parallel",),
            vmem_limit_bytes=_VMEM_LIMIT_BYTES),
        cost_estimate=pl.CostEstimate(
            flops=4 * n * rows * _LANES,
            transcendentals=0,
            bytes_accessed=2 * n * rows * _LANES * itemsize
            + 2 * n_groups * g * _LANES * 4),
    )(x, t)

    # Final lane collapse on N*128 floats (tiny) in plain JAX; any garbage rows
    # from a boundary batch block are sliced away before use.
    inter = inter_l.reshape(n_groups * g, _LANES)[:n].sum(axis=-1)
    tot = tot_l.reshape(n_groups * g, _LANES)[:n].sum(axis=-1)
    return inter, tot


# ---------------------------------------------------------------------------
# Large-D path: streaming reduction over row-chunks with in-kernel tail mask.
# ---------------------------------------------------------------------------
def _make_dice_stream_kernel(*, block_rows, rows, sub, needs_mask, unroll):
    num_sub = block_rows // sub  # static

    def kernel(x_ref, t_ref, o_ref, inter_acc, tot_acc):
        k = pl.program_id(1)

        @pl.when(k == 0)
        def _init():
            inter_acc[...] = jnp.zeros_like(inter_acc)
            tot_acc[...] = jnp.zeros_like(tot_acc)

        base = k * block_rows  # first global row of this block

        def body(i, carry):
            inter, tot = carry
            r = pl.multiple_of(i * sub, sub)
            xs = x_ref[pl.ds(r, sub), :].astype(jnp.float32)
            ts = t_ref[pl.ds(r, sub), :].astype(jnp.float32)
            if needs_mask:
                row_ids = base + r + lax.broadcasted_iota(
                    jnp.int32, (sub, _LANES), 0)
                valid = row_ids < rows
                xs = jnp.where(valid, xs, 0.0)
                ts = jnp.where(valid, ts, 0.0)
            return inter + xs * ts, tot + xs + ts

        zeros = jnp.zeros((sub, _LANES), jnp.float32)
        inter, tot = lax.fori_loop(0, num_sub, body, (zeros, zeros),
                                   unroll=unroll)
        inter_acc[...] += inter
        tot_acc[...] += tot

        @pl.when(k == pl.num_programs(1) - 1)
        def _finalize():
            # Single cross-lane/sublane collapse per sample.
            o_ref[0, 0] = jnp.sum(inter_acc[...])
            o_ref[0, 1] = jnp.sum(tot_acc[...])

    return kernel


def _dice_partials_stream(x, t, n, rows, itemsize, sub):
    # ~2 MiB of native-dtype input per block regardless of dtype width.
    max_block_rows = _MAX_BLOCK_ROWS_F32 * max(1, 4 // itemsize)
    k_steps = pl.cdiv(rows, max_block_rows)
    block_rows = _round_up(pl.cdiv(rows, k_steps), sub)
    if block_rows > rows:  # only when k_steps == 1 and rows % sub != 0
        block_rows = _round_up(pl.cdiv(rows, 2), sub)
    k_steps = pl.cdiv(rows, block_rows)
    needs_mask = (block_rows * k_steps) != rows

    num_sub = block_rows // sub
    if num_sub % 8 == 0:
        unroll = 8
    elif num_sub % 4 == 0:
        unroll = 4
    elif num_sub % 2 == 0:
        unroll = 2
    else:
        unroll = 1

    kernel = _make_dice_stream_kernel(
        block_rows=block_rows, rows=rows, sub=sub,
        needs_mask=needs_mask, unroll=unroll)

    partial = pl.pallas_call(
        kernel,
        out_shape=jax.ShapeDtypeStruct((n, 2), jnp.float32),
        grid_spec=pltpu.PrefetchScalarGridSpec(
            num_scalar_prefetch=0,
            grid=(n, k_steps),  # reduction (row-chunk) axis last
            in_specs=[
                pl.BlockSpec((None, block_rows, _LANES), lambda i, k: (i, k, 0)),
                pl.BlockSpec((None, block_rows, _LANES), lambda i, k: (i, k, 0)),
            ],
            out_specs=pl.BlockSpec(
                (1, 2), lambda i, k: (i, 0),
                memory_space=pltpu.MemorySpace.SMEM),
            scratch_shapes=[
                pltpu.VMEM((sub, _LANES), jnp.float32),
                pltpu.VMEM((sub, _LANES), jnp.float32),
            ],
        ),
        compiler_params=pltpu.CompilerParams(
            dimension_semantics=("parallel", "arbitrary"),
            vmem_limit_bytes=_VMEM_LIMIT_BYTES),
        cost_estimate=pl.CostEstimate(
            flops=4 * n * rows * _LANES,
            transcendentals=0,
            bytes_accessed=2 * n * rows * _LANES * itemsize + n * 2 * 4),
    )(x, t)
    # TODO(synk): on v7x with tiny N, split the row range over a second
    # "parallel" grid axis (separate partials summed in the epilogue) so both
    # TensorCores stream HBM concurrently.
    return partial[:, 0], partial[:, 1]


# ---------------------------------------------------------------------------
# Public entry point (PyTorch DiceLoss.forward semantics).
# ---------------------------------------------------------------------------
def dice_loss(inputs, targets):
    """DiceLoss forward: 1 - mean_n[ 2*(sum(x*t)+1) / (sum(x)+sum(t)+1) ]."""
    assert inputs.shape == targets.shape
    n = inputs.shape[0]
    d = math.prod(inputs.shape[1:])
    itemsize = jnp.dtype(inputs.dtype).itemsize
    sub = _sublane_multiple(inputs.dtype)

    # Flatten per sample (same order as torch .view(N, -1)); keep native dtype,
    # the kernels upcast to f32 after load so HBM traffic stays narrow.
    x = inputs.reshape(n, d)
    t = targets.reshape(n, d)

    # Lane-dense layout: each sample's D elements become a (rows, 128) slab.
    rows = pl.cdiv(d, _LANES)
    d_lanes = rows * _LANES
    if d_lanes != d:
        # TODO(synk): replace this small lane pad with an in-kernel lane mask to
        # avoid the extra HBM copy XLA pad makes; triggers only when D % 128 != 0
        # and pads by < 128 elements per sample (zeros are sum-neutral).
        x = jnp.pad(x, ((0, 0), (0, d_lanes - d)))
        t = jnp.pad(t, ((0, 0), (0, d_lanes - d)))
    x = x.reshape(n, rows, _LANES)
    t = t.reshape(n, rows, _LANES)

    if rows <= _SMALL_D_MAX_ROWS:
        inter, tot = _dice_partials_small(x, t, n, rows, itemsize)
    else:
        inter, tot = _dice_partials_stream(x, t, n, rows, itemsize, sub)

    # Tiny epilogue (N scalars), exactly the PyTorch formula.
    smooth = jnp.float32(1.0)
    dice = 2.0 * (inter + smooth) / (tot + smooth)
    return jnp.float32(1.0) - jnp.sum(dice) / jnp.float32(n)


def _dice_loss_ref(inputs, targets):
    """Pure-JAX reference mirroring the PyTorch forward exactly."""
    n = targets.shape[0]
    smooth = 1.0
    xf = inputs.reshape(n, -1).astype(jnp.float32)
    tf = targets.reshape(n, -1).astype(jnp.float32)
    inter = (xf * tf).sum(axis=1)
    loss = 2.0 * (inter + smooth) / (xf.sum(axis=1) + tf.sum(axis=1) + smooth)
    return 1.0 - loss.sum() / n


if __name__ == "__main__":
    key = jax.random.PRNGKey(0)
    k1, k2, k3, k4 = jax.random.split(key, 4)

    # Case 1: small-D path (batch=2, channels=4, 16x16) -> batched single-step kernel.
    shape_small = (2, 4, 16, 16)
    x1 = jax.nn.sigmoid(jax.random.normal(k1, shape_small, dtype=jnp.float32))
    t1 = (jax.random.uniform(k2, shape_small, dtype=jnp.float32) > 0.5).astype(jnp.float32)
    out1 = jax.block_until_ready(dice_loss(x1, t1))
    ref1 = jax.block_until_ready(_dice_loss_ref(x1, t1))
    assert jnp.allclose(out1, ref1, rtol=1e-5, atol=1e-5), (out1, ref1)

    # Case 2: streaming path (unaligned D -> lane pad + masked tail block, 2 k-steps).
    shape_big = (2, 3, 300, 300)
    x2 = jax.nn.sigmoid(jax.random.normal(k3, shape_big, dtype=jnp.float32))
    t2 = (jax.random.uniform(k4, shape_big, dtype=jnp.float32) > 0.5).astype(jnp.float32)
    out2 = jax.block_until_ready(dice_loss(x2, t2))
    ref2 = jax.block_until_ready(_dice_loss_ref(x2, t2))
    assert jnp.allclose(out2, ref2, rtol=1e-5, atol=1e-5), (out2, ref2)

    print("KERNEL_OK")
</pallas_src>

<mosaic_0001>
module attributes {stable_mosaic.version = 11 : i64} {
  func.func @_dice_small_kernel(%arg0: i32, %arg1: memref<2x8x128xf32, #tpu.memory_space<vmem>>, %arg2: memref<2x8x128xf32, #tpu.memory_space<vmem>>, %arg3: memref<1x2x128xf32, #tpu.memory_space<vmem>>, %arg4: memref<1x2x128xf32, #tpu.memory_space<vmem>>) attributes {dimension_semantics = [#tpu.dimension_semantics<parallel>], iteration_bounds = array<i64: 1>, scalar_prefetch = 0 : i64, scratch_operands = 0 : i64, tpu.core_type = #tpu.core_type<tc>, window_params = [{transform_indices = @transform_0, window_bounds = array<i64: 2, 8, 128>}, {transform_indices = @transform_1, window_bounds = array<i64: 2, 8, 128>}, {transform_indices = @transform_2, window_bounds = array<i64: 1, 2, 128>}, {transform_indices = @transform_3, window_bounds = array<i64: 1, 2, 128>}]} {
    %c0 = arith.constant 0 : index
    %c0_0 = arith.constant 0 : index
    %c0_1 = arith.constant 0 : index
    %0 = vector.load %arg1[%c0, %c0_0, %c0_1] : memref<2x8x128xf32, #tpu.memory_space<vmem>>, vector<2x8x128xf32>
    %c0_2 = arith.constant 0 : index
    %c0_3 = arith.constant 0 : index
    %c0_4 = arith.constant 0 : index
    %1 = vector.load %arg2[%c0_2, %c0_3, %c0_4] : memref<2x8x128xf32, #tpu.memory_space<vmem>>, vector<2x8x128xf32>
    %2 = arith.mulf %0, %1 : vector<2x8x128xf32>
    %cst = arith.constant dense<0.000000e+00> : vector<2x128xf32>
    %3 = vector.multi_reduction <add>, %2, %cst [1] : vector<2x8x128xf32> to vector<2x128xf32>
    %c0_5 = arith.constant 0 : index
    %c0_6 = arith.constant 0 : index
    %c0_7 = arith.constant 0 : index
    %4 = vector.load %arg3[%c0_5, %c0_6, %c0_7] : memref<1x2x128xf32, #tpu.memory_space<vmem>>, vector<1x2x128xf32>
    %5 = vector.shape_cast %4 : vector<1x2x128xf32> to vector<2x128xf32>
    %6 = vector.shape_cast %3 : vector<2x128xf32> to vector<1x2x128xf32>
    tpu.vector_store %arg3[%c0_5, %c0_6, %c0_7], %6 {strides = array<i32>} : memref<1x2x128xf32, #tpu.memory_space<vmem>>, vector<1x2x128xf32>,
    %7 = arith.addf %0, %1 : vector<2x8x128xf32>
    %cst_8 = arith.constant dense<0.000000e+00> : vector<2x128xf32>
    %8 = vector.multi_reduction <add>, %7, %cst_8 [1] : vector<2x8x128xf32> to vector<2x128xf32>
    %c0_9 = arith.constant 0 : index
    %c0_10 = arith.constant 0 : index
    %c0_11 = arith.constant 0 : index
    %9 = vector.load %arg4[%c0_9, %c0_10, %c0_11] : memref<1x2x128xf32, #tpu.memory_space<vmem>>, vector<1x2x128xf32>
    %10 = vector.shape_cast %9 : vector<1x2x128xf32> to vector<2x128xf32>
    %11 = vector.shape_cast %8 : vector<2x128xf32> to vector<1x2x128xf32>
    tpu.vector_store %arg4[%c0_9, %c0_10, %c0_11], %11 {strides = array<i32>} : memref<1x2x128xf32, #tpu.memory_space<vmem>>, vector<1x2x128xf32>,
    return
  }
  func.func @transform_0(%arg0: i32) -> (i32, i32, i32) {
    %c0_i32 = arith.constant 0 : i32
    %c0_i32_0 = arith.constant 0 : i32
    %c0_i32_1 = arith.constant 0 : i32
    return %arg0, %c0_i32, %c0_i32_0 : i32, i32, i32
  }
  func.func @transform_1(%arg0: i32) -> (i32, i32, i32) {
    %c0_i32 = arith.constant 0 : i32
    %c0_i32_0 = arith.constant 0 : i32
    %c0_i32_1 = arith.constant 0 : i32
    return %arg0, %c0_i32, %c0_i32_0 : i32, i32, i32
  }
  func.func @transform_2(%arg0: i32) -> (i32, i32, i32) {
    %c0_i32 = arith.constant 0 : i32
    %c0_i32_0 = arith.constant 0 : i32
    %c0_i32_1 = arith.constant 0 : i32
    return %arg0, %c0_i32, %c0_i32_0 : i32, i32, i32
  }
  func.func @transform_3(%arg0: i32) -> (i32, i32, i32) {
    %c0_i32 = arith.constant 0 : i32
    %c0_i32_0 = arith.constant 0 : i32
    %c0_i32_1 = arith.constant 0 : i32
    return %arg0, %c0_i32, %c0_i32_0 : i32, i32, i32
  }
}

</mosaic_0001>

<llo_original>
// kernel: tpu_custom_call.1
$region0: #{tpu_custom_call.1}
  #allocation0 [shape = 'u32[]', space=smem, size = 0x4, offset = 0x4, fixed_abs, tag = 'smem constant byte address 0x4 - core index']
  #allocation1 [shape = 'u32[144,128]{1,0:T(1,128)}', space=vmem, size = 0x12000, scoped, tag = 'internal scratch']
  %s0 = inlined_call_operand.hbm [shape: f32[2,8,128], index: 0, kind: input, shape index: {}]
  %s1 = inlined_call_operand.hbm [shape: f32[2,8,128], index: 1, kind: input, shape index: {}]
  %s2 = inlined_call_operand.hbm [shape: f32[1,2,128], index: 2, kind: output, shape index: {0}]
  %s3 = inlined_call_operand.hbm [shape: f32[1,2,128], index: 3, kind: output, shape index: {1}]
  %4 = xla_tuple %s2, %s3
  %s5 = sld [smem:[#allocation0]]
  $region34: #{tpu_custom_call.1} parent=0
    _
  %s7 = ssub.s32 1, %s5
  %s8 = scalar_select 0, %s7, %s5
  $region1: #{tpu_custom_call.1} parent=0
    #allocation2 [shape = 'u8[8192]{0}', space=vmem, size = 0x2000, scoped, tag = 'input window, operand 0, single buffered']
    #allocation3 [shape = 's32[1]{0}', space=sflag, size = 0x4, scoped, tag = 'scoped memory for tpu_custom_call.1']
    #allocation4 [shape = 's32[1]{0}', space=sflag, size = 0x4, scoped, tag = 'scoped memory for tpu_custom_call.1']
    #allocation5 [shape = 'u8[8192]{0}', space=vmem, size = 0x2000, scoped, tag = 'input window, operand 1, single buffered']
    #allocation6 [shape = 's32[1]{0}', space=sflag, size = 0x4, scoped, tag = 'scoped memory for tpu_custom_call.1']
    #allocation7 [shape = 'u8[1024]{0}', space=vmem, size = 0x400, scoped, tag = 'output window, operand 0, single buffered']
    #allocation8 [shape = 'u8[1024]{0}', space=vmem, size = 0x400, scoped, tag = 'output window, operand 1, single buffered']
    #allocation9 [shape = 's32[1]{0}', space=sflag, size = 0x4, scoped, tag = 'scoped memory for tpu_custom_call.1']
    %9 = vsyncpa [#allocation3], 0
    %10 = vsyncpa [#allocation6], 0
    %11 = vsyncpa [#allocation4], 0
    %12 = vsyncpa [#allocation9], 0
    // Predicated region
    $region2: #{tpu_custom_call.1} parent=1 // pred_check
      _
    $region3: #{tpu_custom_call.1} parent=1 // pred_check_branch
      %14 = sbr.rel (0) target = $region5
    $region4: #{tpu_custom_call.1} parent=1 // pred_region
      %s16 = ssub.s32 256, 256
      %17 = vsyncadd [#allocation3], %s16
      %s18 = sshll.u32 [#allocation2], 4
      %s19 = int_to_ptr.vmem [resolvable:$true] %s18
      %24 = dma.hbm_to_vmem [thread:$0]  %s0, 256, %s19, [#allocation3], 128, 128, 8
    $region5: #{tpu_custom_call.1} parent=1 // pred_fallthru
      _
    // Predicated region
    $region6: #{tpu_custom_call.1} parent=1 // pred_check
      _
    $region7: #{tpu_custom_call.1} parent=1 // pred_check_branch
      %26 = sbr.rel (0) target = $region9
    $region8: #{tpu_custom_call.1} parent=1 // pred_region
      %s28 = ssub.s32 256, 256
      %29 = vsyncadd [#allocation6], %s28
      %s30 = sshll.u32 [#allocation5], 4
      %s31 = int_to_ptr.vmem [resolvable:$true] %s30
      %36 = dma.hbm_to_vmem [thread:$0]  %s1, 256, %s31, [#allocation6], 128, 128, 8
    $region9: #{tpu_custom_call.1} parent=1 // pred_fallthru
      _
    // Predicated region
    $region10: #{tpu_custom_call.1} parent=1 // pred_check
      _
    $region11: #{tpu_custom_call.1} parent=1 // pred_check_branch
      %38 = sbr.rel (0) target = $region13
    $region12: #{tpu_custom_call.1} parent=1 // pred_region
      %39 = dma.done [#allocation3], 256
    $region13: #{tpu_custom_call.1} parent=1 // pred_fallthru
      _
    // Predicated region
    $region14: #{tpu_custom_call.1} parent=1 // pred_check
      _
    $region15: #{tpu_custom_call.1} parent=1 // pred_check_branch
      %41 = sbr.rel (0) target = $region17
    $region16: #{tpu_custom_call.1} parent=1 // pred_region
      %42 = dma.done [#allocation6], 256
    $region17: #{tpu_custom_call.1} parent=1 // pred_fallthru
      _
    %v43 = vld [vmem:[#allocation2] sm:$0xff]
    %v44 = vld [vmem:[#allocation2 + $0x8] sm:$0xff]
    %v45 = vld [vmem:[#allocation5] sm:$0xff]
    %v46 = vld [vmem:[#allocation5 + $0x8] sm:$0xff]
    %v47 = vmul.f32 %v43, %v45
    %v48 = vmul.f32 %v44, %v46
    %v49 = vrot.slane %v47, 4
    %v50 = vadd.f32 %v47, %v49
    %v51 = vrot.slane %v50, 2
    %v52 = vadd.f32 %v50, %v51
    %v53 = vrot.slane %v52, 1
    %v54 = vadd.f32 %v52, %v53
    %v55 = vrot.slane %v48, 4
    %v56 = vadd.f32 %v48, %v55
    %v57 = vrot.slane %v56, 2
    %v58 = vadd.f32 %v56, %v57
    %v59 = vrot.slane %v58, 1
    %v60 = vadd.f32 %v58, %v59
    %vm63 = vcmask 1041409
    %v64 = vsel %vm63, %v60, %v54
    %66 = vst [vmem:[#allocation7] sm:$0x3] %v64
    %v67 = vadd.f32 %v43, %v45
    %v68 = vadd.f32 %v44, %v46
    %v69 = vrot.slane %v67, 4
    %v70 = vadd.f32 %v67, %v69
    %v71 = vrot.slane %v70, 2
    %v72 = vadd.f32 %v70, %v71
    %v73 = vrot.slane %v72, 1
    %v74 = vadd.f32 %v72, %v73
    %v75 = vrot.slane %v68, 4
    %v76 = vadd.f32 %v68, %v75
    %v77 = vrot.slane %v76, 2
    %v78 = vadd.f32 %v76, %v77
    %v79 = vrot.slane %v78, 1
    %v80 = vadd.f32 %v78, %v79
    %v83 = vsel %vm63, %v80, %v74
    %85 = vst [vmem:[#allocation8] sm:$0x3] %v83
    // Predicated region
    $region18: #{tpu_custom_call.1} parent=1 // pred_check
      _
    $region19: #{tpu_custom_call.1} parent=1 // pred_check_branch
      %87 = sbr.rel (0) target = $region21
    $region20: #{tpu_custom_call.1} parent=1 // pred_region
      %s89 = ssub.s32 32, 32
      %90 = vsyncadd [#allocation4], %s89
      %s92 = sshll.u32 [#allocation7], 4
      %s93 = int_to_ptr.vmem [resolvable:$true] %s92
      %95 = dma.vmem_to_hbm [thread:$0]  %s93, 32, %s2, [#allocation4]
    $region21: #{tpu_custom_call.1} parent=1 // pred_fallthru
      _
    // Predicated region
    $region22: #{tpu_custom_call.1} parent=1 // pred_check
      _
    $region23: #{tpu_custom_call.1} parent=1 // pred_check_branch
      %97 = sbr.rel (0) target = $region25
    $region24: #{tpu_custom_call.1} parent=1 // pred_region
      %s99 = ssub.s32 32, 32
      %100 = vsyncadd [#allocation9], %s99
      %s102 = sshll.u32 [#allocation8], 4
      %s103 = int_to_ptr.vmem [resolvable:$true] %s102
      %105 = dma.vmem_to_hbm [thread:$0]  %s103, 32, %s3, [#allocation9]
    $region25: #{tpu_custom_call.1} parent=1 // pred_fallthru
      _
    // Predicated region
    $region26: #{tpu_custom_call.1} parent=1 // pred_check
      _
    $region27: #{tpu_custom_call.1} parent=1 // pred_check_branch
      %107 = sbr.rel (0) target = $region29
    $region28: #{tpu_custom_call.1} parent=1 // pred_region
      %108 = dma.done [#allocation4], 32
    $region29: #{tpu_custom_call.1} parent=1 // pred_fallthru
      _
    // Predicated region
    $region30: #{tpu_custom_call.1} parent=1 // pred_check
      _
    $region31: #{tpu_custom_call.1} parent=1 // pred_check_branch
      %110 = sbr.rel (0) target = $region33
    $region32: #{tpu_custom_call.1} parent=1 // pred_region
      %111 = dma.done [#allocation9], 32
    $region33: #{tpu_custom_call.1} parent=1 // pred_fallthru
      _
    %112 = vsyncpa [#allocation3], 1
    %113 = vsyncpa [#allocation6], 1
    %114 = vsyncpa [#allocation4], 1
    %115 = vsyncpa [#allocation9], 1

</llo_original>
